<compile_context>
chip_gen: v5e
topology: v5e:2x2
jax: 0.10.0
libtpu: 0.0.40
codegen_flags: <defaults>
</compile_context>

<pallas_src>
import jax
import jax.numpy as jnp
from jax.experimental import pallas as pl
from jax.experimental.pallas import tpu as pltpu


def _round_up(x: int, m: int) -> int:
    return (x + m - 1) // m * m


def _largest_divisor(dim: int, cap: int, align: int):
    """Largest d <= cap with d % align == 0 and dim % d == 0, or None."""
    if align > dim or dim % align != 0:
        return None
    c = (min(cap, dim) // align) * align
    for d in range(c, 0, -align):
        if dim % d == 0:
            return d
    return None


def _pick_tile(dim_padded: int, cap: int, base_align: int, preferred_align: int = 256) -> int:
    """Pick a tile that DIVIDES the padded dim (no overshoot), preferring MXU-friendly
    256-multiples on v6e/v7x unless that would shrink the tile by more than 2x."""
    base = _largest_divisor(dim_padded, cap, base_align)
    pref = _largest_divisor(dim_padded, cap, preferred_align)
    if pref is not None and 2 * pref >= (base or 0):
        return pref
    return base if base is not None else dim_padded


# ---------------------------------------------------------------------------
# Kernels
# ---------------------------------------------------------------------------

def _linear_relu_kernel_direct(x_ref, w_ref, b_ref, o_ref):
    """f32 output: accumulate directly into the resident output block (no scratch)."""
    k = pl.program_id(2)

    @pl.when(k == 0)
    def _init():
        o_ref[...] = jnp.zeros_like(o_ref)

    # w is already (K, N): contraction on the RHS sublane axis -> native MXU feed.
    o_ref[...] += jnp.dot(x_ref[...], w_ref[...], preferred_element_type=jnp.float32)

    @pl.when(k == pl.num_programs(2) - 1)
    def _finalize():
        o_ref[...] = jnp.maximum(o_ref[...] + b_ref[...], 0.0)


def _linear_relu_kernel_acc(x_ref, w_ref, b_ref, o_ref, acc_ref):
    """Non-f32 output: f32 VMEM accumulator, cast in the epilogue."""
    k = pl.program_id(2)

    @pl.when(k == 0)
    def _init():
        acc_ref[...] = jnp.zeros_like(acc_ref)

    acc_ref[...] += jnp.dot(x_ref[...], w_ref[...], preferred_element_type=jnp.float32)

    @pl.when(k == pl.num_programs(2) - 1)
    def _finalize():
        y = acc_ref[...] + b_ref[...]
        o_ref[...] = jnp.maximum(y, 0.0).astype(o_ref.dtype)


# ---------------------------------------------------------------------------
# pallas_call builder
# ---------------------------------------------------------------------------

def _pallas_linear_relu(x_p, w_p, b_p, *, tm, tn, tk, out_dtype, buffered):
    Mp, Kp = x_p.shape
    Np = w_p.shape[1]
    grid = (Mp // tm, Np // tn, Kp // tk)
    gi, gj, gk = grid

    stream_kwargs = {"pipeline_mode": pl.Buffered(3)} if buffered else {}
    in_specs = [
        pl.BlockSpec((tm, tk), lambda i, j, k: (i, k), **stream_kwargs),   # x tile
        pl.BlockSpec((tk, tn), lambda i, j, k: (k, j), **stream_kwargs),   # w tile (K, N)
        pl.BlockSpec((1, tn), lambda i, j, k: (0, j)),                     # bias tile
    ]
    out_specs = pl.BlockSpec((tm, tn), lambda i, j, k: (i, j))

    out_itemsize = jnp.dtype(out_dtype).itemsize
    direct_f32 = jnp.dtype(out_dtype) == jnp.dtype(jnp.float32)
    if direct_f32:
        kernel = _linear_relu_kernel_direct
        scratch_shapes = []
        acc_bytes = 0
    else:
        kernel = _linear_relu_kernel_acc
        scratch_shapes = [pltpu.VMEM((tm, tn), jnp.float32)]
        acc_bytes = tm * tn * 4

    # VMEM actually needed: pipelined input buffers + output double buffer (+acc),
    # plus generous margin; capped well below v7x's 64 MiB physical VMEM.
    in_itemsize = x_p.dtype.itemsize
    nbuf = 3 if buffered else 2
    vmem_need = (nbuf * tm * tk * in_itemsize        # x buffers
                 + nbuf * tk * tn * in_itemsize      # w buffers
                 + 2 * tn * 4                        # bias buffers
                 + 2 * tm * tn * out_itemsize        # output buffers
                 + acc_bytes)
    vmem_limit = int(min(2 * vmem_need + (16 << 20), 48 << 20))

    cost = pl.CostEstimate(
        flops=2 * Mp * Np * Kp,
        transcendentals=0,
        bytes_accessed=(gj * Mp * Kp * in_itemsize       # x re-streamed once per j tile
                        + gi * Kp * Np * in_itemsize     # w re-streamed once per i tile
                        + gi * gj * tn * 4               # bias per (i, j) tile
                        + Mp * Np * out_itemsize),       # output written once
    )

    return pl.pallas_call(
        kernel,
        out_shape=jax.ShapeDtypeStruct((Mp, Np), out_dtype),
        grid=grid,
        in_specs=in_specs,
        out_specs=out_specs,
        scratch_shapes=scratch_shapes,
        compiler_params=pltpu.CompilerParams(
            dimension_semantics=("parallel", "parallel", "arbitrary"),
            vmem_limit_bytes=vmem_limit,
        ),
        cost_estimate=cost,
    )(x_p, w_p, b_p)


# ---------------------------------------------------------------------------
# Layer wrapper (weight prep hoisted to construction time)
# ---------------------------------------------------------------------------

class PallasLinearReLU:
    """Pallas-TPU equivalent of F.relu(nn.Linear(input_size, output_size)(x))."""

    def __init__(self, weight, bias, *, compute_dtype=jnp.bfloat16,
                 tm_cap=512, tn_cap=1024, tk_cap=512):
        N, K = weight.shape
        assert bias.shape == (N,)
        self.n_out, self.k_in = N, K
        self.compute_dtype = compute_dtype
        self.tm_cap = tm_cap

        # One-time layout plumbing (amortized across all forward calls):
        #   (N, K) -> (Kp, Np) bf16 weight, lane-dense N, K on sublanes; f32 bias row.
        self.Kp = _round_up(K, 128)
        self.Np = _round_up(N, 128)
        w_kn = weight.T.astype(compute_dtype)
        self.w_p = jnp.pad(w_kn, ((0, self.Kp - K), (0, self.Np - N)))
        self.b_p = jnp.pad(bias.astype(jnp.float32), (0, self.Np - N)).reshape(1, self.Np)

        # Reduction / output-lane tiles depend only on K, N -> pick once.
        self.tk = _pick_tile(self.Kp, tk_cap, 128)
        self.tn = _pick_tile(self.Np, tn_cap, 128)

        self._use_buffered = True   # flips to False if Buffered(3) fails to lower

    def __call__(self, x):
        B, K = x.shape
        assert K == self.k_in
        out_dtype = x.dtype

        Mp = _round_up(B, 8)
        tm = _pick_tile(Mp, self.tm_cap, 8)
        tn = self.tn

        # v7x has 2 TensorCores sharded over the parallel grid axes: avoid a
        # degenerate 1x1 parallel grid when the shape allows a clean split.
        if (Mp // tm) * (self.Np // tn) < 2:
            if self.Np % 256 == 0 and self.Np >= 256:
                tn = self.Np // 2
            elif Mp % 16 == 0 and Mp >= 16:
                tm = Mp // 2

        x_p = jnp.pad(x.astype(self.compute_dtype),
                      ((0, Mp - B), (0, self.Kp - K)))

        last_err = None
        for buffered in ([True, False] if self._use_buffered else [False]):
            try:
                out_p = _pallas_linear_relu(
                    x_p, self.w_p, self.b_p,
                    tm=tm, tn=tn, tk=self.tk,
                    out_dtype=out_dtype, buffered=buffered)
                self._use_buffered = buffered
                return out_p[:B, :self.n_out]
            except Exception as e:  # fall back to default double-buffering
                last_err = e
        raise last_err


def layer_forward(x, weight, bias, **kwargs):
    """One-shot convenience wrapper (prep not amortized; prefer PallasLinearReLU)."""
    return PallasLinearReLU(weight, bias, **kwargs)(x)


def _reference(x, weight, bias, compute_dtype=jnp.bfloat16):
    # Same numerics as the kernel: bf16 operands, f32 accumulation.
    y = jnp.dot(x.astype(compute_dtype), weight.T.astype(compute_dtype),
                preferred_element_type=jnp.float32) + bias.astype(jnp.float32)
    return jnp.maximum(y, 0.0).astype(x.dtype)


if __name__ == "__main__":
    # Small shapes consistent with the module: batch=8, input_size=32, output_size=16
    batch, input_size, output_size = 8, 32, 16

    key = jax.random.PRNGKey(0)
    kx, kw, kb = jax.random.split(key, 3)

    x = jax.random.normal(kx, (batch, input_size), dtype=jnp.float32)
    bound = 1.0 / jnp.sqrt(jnp.float32(input_size))
    weight = jax.random.uniform(kw, (output_size, input_size),
                                minval=-bound, maxval=bound, dtype=jnp.float32)
    bias = jax.random.uniform(kb, (output_size,),
                              minval=-bound, maxval=bound, dtype=jnp.float32)

    layer = PallasLinearReLU(weight, bias)   # weight prep hoisted to init
    out = layer(x)
    jax.block_until_ready(out)
    assert out.shape == (batch, output_size)
    ref = _reference(x, weight, bias)
    assert jnp.allclose(out, ref, atol=1e-3, rtol=1e-3), \
        float(jnp.max(jnp.abs(out - ref)))

    # Repeated call on the cached layer (exercises the amortized-weight path).
    out_again = layer(x)
    jax.block_until_ready(out_again)
    assert jnp.allclose(out_again, ref, atol=1e-3, rtol=1e-3)

    # Larger run: N=640 / K=384 exercises divisor-based tiling (no pad overshoot)
    # and the megacore split (grid gets >=2 parallel blocks).
    B2, D_in2, D_out2 = 192, 384, 640
    k2x, k2w, k2b = jax.random.split(jax.random.PRNGKey(1), 3)
    x2 = jax.random.normal(k2x, (B2, D_in2), dtype=jnp.float32)
    bnd2 = 1.0 / jnp.sqrt(jnp.float32(D_in2))
    w2 = jax.random.uniform(k2w, (D_out2, D_in2),
                            minval=-bnd2, maxval=bnd2, dtype=jnp.float32)
    bias2 = jax.random.uniform(k2b, (D_out2,),
                               minval=-bnd2, maxval=bnd2, dtype=jnp.float32)
    layer2 = PallasLinearReLU(w2, bias2)
    out2 = layer2(x2)
    jax.block_until_ready(out2)
    assert out2.shape == (B2, D_out2)
    ref2 = _reference(x2, w2, bias2)
    assert jnp.allclose(out2, ref2, atol=2e-3, rtol=2e-3), \
        float(jnp.max(jnp.abs(out2 - ref2)))

    print("KERNEL_OK")
</pallas_src>

<mosaic_0001>
module attributes {stable_mosaic.version = 11 : i64} {
  func.func @_linear_relu_kernel_direct(%arg0: i32, %arg1: i32, %arg2: i32, %arg3: memref<8x128xbf16, #tpu.memory_space<vmem>>, %arg4: memref<128x128xbf16, #tpu.memory_space<vmem>>, %arg5: memref<1x128xf32, #tpu.memory_space<vmem>>, %arg6: memref<8x128xf32, #tpu.memory_space<vmem>>) attributes {dimension_semantics = [#tpu.dimension_semantics<parallel>, #tpu.dimension_semantics<parallel>, #tpu.dimension_semantics<arbitrary>], iteration_bounds = array<i64: 1, 1, 1>, scalar_prefetch = 0 : i64, scratch_operands = 0 : i64, tpu.core_type = #tpu.core_type<tc>, window_params = [{transform_indices = @transform_0, window_bounds = array<i64: 8, 128>}, {transform_indices = @transform_1, window_bounds = array<i64: 128, 128>}, {transform_indices = @transform_2, window_bounds = array<i64: 1, 128>}, {transform_indices = @transform_3, window_bounds = array<i64: 8, 128>}]} {
    %c0_i32 = arith.constant 0 : i32
    %0 = arith.cmpi eq, %arg2, %c0_i32 : i32
    %1 = arith.extui %0 : i1 to i32
    %c0_i32_0 = arith.constant 0 : i32
    %2 = arith.cmpi ne, %1, %c0_i32_0 : i32
    scf.if %2 {
      %cst_10 = arith.constant 0.000000e+00 : f32
      %12 = vector.broadcast %cst_10 : f32 to vector<8x128xf32>
      %c0_11 = arith.constant 0 : index
      %c0_12 = arith.constant 0 : index
      %13 = vector.load %arg6[%c0_11, %c0_12] : memref<8x128xf32, #tpu.memory_space<vmem>>, vector<8x128xf32>
      tpu.vector_store %arg6[%c0_11, %c0_12], %12 {strides = array<i32>} : memref<8x128xf32, #tpu.memory_space<vmem>>, vector<8x128xf32>,
    } else {
    }
    %c0 = arith.constant 0 : index
    %c0_1 = arith.constant 0 : index
    %3 = vector.load %arg6[%c0, %c0_1] : memref<8x128xf32, #tpu.memory_space<vmem>>, vector<8x128xf32>
    %c0_2 = arith.constant 0 : index
    %c0_3 = arith.constant 0 : index
    %4 = vector.load %arg3[%c0_2, %c0_3] : memref<8x128xbf16, #tpu.memory_space<vmem>>, vector<8x128xbf16>
    %c0_4 = arith.constant 0 : index
    %c0_5 = arith.constant 0 : index
    %5 = vector.load %arg4[%c0_4, %c0_5] : memref<128x128xbf16, #tpu.memory_space<vmem>>, vector<128x128xbf16>
    %cst = arith.constant dense<0.000000e+00> : vector<8x128xf32>
    %6 = tpu.matmul %4, %5, %cst {dimension_numbers = #tpu.dot_dimension_numbers<[1], [0], [0], [1], [0, 0, 1, 1], [], []>} : vector<8x128xbf16>, vector<128x128xbf16>, vector<8x128xf32> -> vector<8x128xf32>
    %7 = arith.addf %3, %6 : vector<8x128xf32>
    %c0_6 = arith.constant 0 : index
    %c0_7 = arith.constant 0 : index
    %8 = vector.load %arg6[%c0_6, %c0_7] : memref<8x128xf32, #tpu.memory_space<vmem>>, vector<8x128xf32>
    tpu.vector_store %arg6[%c0_6, %c0_7], %7 {strides = array<i32>} : memref<8x128xf32, #tpu.memory_space<vmem>>, vector<8x128xf32>,
    %c0_i32_8 = arith.constant 0 : i32
    %9 = arith.cmpi eq, %arg2, %c0_i32_8 : i32
    %10 = arith.extui %9 : i1 to i32
    %c0_i32_9 = arith.constant 0 : i32
    %11 = arith.cmpi ne, %10, %c0_i32_9 : i32
    scf.if %11 {
      %c0_10 = arith.constant 0 : index
      %c0_11 = arith.constant 0 : index
      %12 = vector.load %arg6[%c0_10, %c0_11] : memref<8x128xf32, #tpu.memory_space<vmem>>, vector<8x128xf32>
      %c0_12 = arith.constant 0 : index
      %c0_13 = arith.constant 0 : index
      %13 = vector.load %arg5[%c0_12, %c0_13] : memref<1x128xf32, #tpu.memory_space<vmem>>, vector<1x128xf32>
      %14 = vector.broadcast %13 : vector<1x128xf32> to vector<8x128xf32>
      %15 = arith.addf %12, %14 : vector<8x128xf32>
      %cst_14 = arith.constant 0.000000e+00 : f32
      %16 = vector.broadcast %cst_14 : f32 to vector<8x128xf32>
      %17 = arith.maximumf %15, %16 : vector<8x128xf32>
      %c0_15 = arith.constant 0 : index
      %c0_16 = arith.constant 0 : index
      %18 = vector.load %arg6[%c0_15, %c0_16] : memref<8x128xf32, #tpu.memory_space<vmem>>, vector<8x128xf32>
      tpu.vector_store %arg6[%c0_15, %c0_16], %17 {strides = array<i32>} : memref<8x128xf32, #tpu.memory_space<vmem>>, vector<8x128xf32>,
    } else {
    }
    return
  }
  func.func @transform_0(%arg0: i32, %arg1: i32, %arg2: i32) -> (i32, i32) {
    %c0_i32 = arith.constant 0 : i32
    return %arg0, %arg2 : i32, i32
  }
  func.func @transform_1(%arg0: i32, %arg1: i32, %arg2: i32) -> (i32, i32) {
    %c0_i32 = arith.constant 0 : i32
    return %arg2, %arg1 : i32, i32
  }
  func.func @transform_2(%arg0: i32, %arg1: i32, %arg2: i32) -> (i32, i32) {
    %c0_i32 = arith.constant 0 : i32
    %c0_i32_0 = arith.constant 0 : i32
    return %c0_i32, %arg1 : i32, i32
  }
  func.func @transform_3(%arg0: i32, %arg1: i32, %arg2: i32) -> (i32, i32) {
    %c0_i32 = arith.constant 0 : i32
    return %arg0, %arg1 : i32, i32
  }
}

</mosaic_0001>

<llo_original>
// kernel: tpu_custom_call.1
$region0: #{tpu_custom_call.1}
  #allocation0 [shape = 'u32[]', space=smem, size = 0x4, offset = 0x4, fixed_abs, tag = 'smem constant byte address 0x4 - core index']
  #allocation1 [shape = 'u32[72,128]{1,0:T(1,128)}', space=vmem, size = 0x9000, scoped, tag = 'internal scratch']
  %s0 = inlined_call_operand.hbm [shape: bf16[8,128], index: 0, kind: input, shape index: {}]
  %s1 = inlined_call_operand.hbm [shape: bf16[128,128], index: 1, kind: input, shape index: {}]
  %s2 = inlined_call_operand.vmem [shape: f32[1,128], index: 2, kind: input, shape index: {}]
  %s3 = inlined_call_operand.hbm [shape: f32[8,128], index: 3, kind: output, shape index: {}]
  %s4 = sld [smem:[#allocation0]]
  $region38: #{tpu_custom_call.1} parent=0
    _
  %s6 = ssub.s32 1, %s4
  %s7 = scalar_select 0, %s6, %s4
  $region1: #{tpu_custom_call.1} parent=0
    #allocation2 [shape = 'u8[2048]{0}', space=vmem, size = 0x800, scoped, tag = 'input window, operand 0, single buffered']
    #allocation3 [shape = 's32[1]{0}', space=sflag, size = 0x4, scoped, tag = 'scoped memory for tpu_custom_call.1']
    #allocation4 [shape = 's32[1]{0}', space=sflag, size = 0x4, scoped, tag = 'scoped memory for tpu_custom_call.1']
    #allocation5 [shape = 'u8[32768]{0}', space=vmem, size = 0x8000, scoped, tag = 'input window, operand 1, single buffered']
    #allocation6 [shape = 's32[1]{0}', space=sflag, size = 0x4, scoped, tag = 'scoped memory for tpu_custom_call.1']
    #allocation7 [shape = 'u8[4096]{0}', space=vmem, size = 0x1000, scoped, tag = 'output window, operand 0, single buffered']
    %8 = vsyncpa [#allocation3], 0
    %9 = vsyncpa [#allocation6], 0
    %10 = vsyncpa [#allocation4], 0
    // Predicated region
    $region2: #{tpu_custom_call.1} parent=1 // pred_check
      _
    $region3: #{tpu_custom_call.1} parent=1 // pred_check_branch
      %12 = sbr.rel (0) target = $region5
    $region4: #{tpu_custom_call.1} parent=1 // pred_region
      %14 = vsyncadd [#allocation3], 0
      %s16 = sshll.u32 %s0, 4
      %s17 = int_to_ptr.hbm [resolvable:$true] %s16
      %s18 = sshll.u32 [#allocation2], 4
      %s19 = int_to_ptr.vmem [resolvable:$true] %s18
      %21 = dma.hbm_to_vmem [thread:$0]  %s17, 64, %s19, [#allocation3]
    $region5: #{tpu_custom_call.1} parent=1 // pred_fallthru
      _
    // Predicated region
    $region6: #{tpu_custom_call.1} parent=1 // pred_check
      _
    $region7: #{tpu_custom_call.1} parent=1 // pred_check_branch
      %23 = sbr.rel (0) target = $region9
    $region8: #{tpu_custom_call.1} parent=1 // pred_region
      %25 = vsyncadd [#allocation6], 0
      %s26 = sshll.u32 %s1, 4
      %s27 = int_to_ptr.hbm [resolvable:$true] %s26
      %s28 = sshll.u32 [#allocation5], 4
      %s29 = int_to_ptr.vmem [resolvable:$true] %s28
      %34 = dma.hbm_to_vmem [thread:$0]  %s27, 1024, %s29, [#allocation6], 64, 64, 4
    $region9: #{tpu_custom_call.1} parent=1 // pred_fallthru
      _
    // Predicated region
    $region10: #{tpu_custom_call.1} parent=1 // pred_check
      _
    $region11: #{tpu_custom_call.1} parent=1 // pred_check_branch
      %36 = sbr.rel (0) target = $region13
    $region12: #{tpu_custom_call.1} parent=1 // pred_region
      _
    $region13: #{tpu_custom_call.1} parent=1 // pred_fallthru
      _
    // Predicated region
    $region14: #{tpu_custom_call.1} parent=1 // pred_check
      _
    $region15: #{tpu_custom_call.1} parent=1 // pred_check_branch
      %38 = sbr.rel (0) target = $region17
    $region16: #{tpu_custom_call.1} parent=1 // pred_region
      %40 = dma.done [#allocation3], 64
    $region17: #{tpu_custom_call.1} parent=1 // pred_fallthru
      _
    // Predicated region
    $region18: #{tpu_custom_call.1} parent=1 // pred_check
      _
    $region19: #{tpu_custom_call.1} parent=1 // pred_check_branch
      %42 = sbr.rel (0) target = $region21
    $region20: #{tpu_custom_call.1} parent=1 // pred_region
      %44 = dma.done [#allocation6], 1024
    $region21: #{tpu_custom_call.1} parent=1 // pred_fallthru
      _
    %p45 = scmp.eq.s32.totalorder 0, 0
    // Predicated region
    $region22: #{tpu_custom_call.1} parent=1 // pred_check
      %p46 = pneg %p45
    $region23: #{tpu_custom_call.1} parent=1 // pred_check_branch
      %48 = sbr.rel (%p46) target = $region25
    $region24: #{tpu_custom_call.1} parent=1 // pred_region
      %49 = vst [vmem:[#allocation7] sm:$0xff] 0.0
    $region25: #{tpu_custom_call.1} parent=1 // pred_fallthru
      _
    %v50 = vld [vmem:[#allocation7] sm:$0xff]
    %v51 = vld [vmem:[#allocation2] sm:$0xf]
    %v52 = vld [vmem:[#allocation5] sm:$0xf]
    %v53 = vld [vmem:[#allocation5 + $0x4] sm:$0xf]
    %v54 = vld [vmem:[#allocation5 + $0x8] sm:$0xf]
    %v55 = vld [vmem:[#allocation5 + $0xc] sm:$0xf]
    %v56 = vld [vmem:[#allocation5 + $0x10] sm:$0xf]
    %v57 = vld [vmem:[#allocation5 + $0x14] sm:$0xf]
    %v58 = vld [vmem:[#allocation5 + $0x18] sm:$0xf]
    %v59 = vld [vmem:[#allocation5 + $0x1c] sm:$0xf]
    %v60 = vld [vmem:[#allocation5 + $0x20] sm:$0xf]
    %v61 = vld [vmem:[#allocation5 + $0x24] sm:$0xf]
    %v62 = vld [vmem:[#allocation5 + $0x28] sm:$0xf]
    %v63 = vld [vmem:[#allocation5 + $0x2c] sm:$0xf]
    %v64 = vld [vmem:[#allocation5 + $0x30] sm:$0xf]
    %v65 = vld [vmem:[#allocation5 + $0x34] sm:$0xf]
    %v66 = vld [vmem:[#allocation5 + $0x38] sm:$0xf]
    %v67 = vld [vmem:[#allocation5 + $0x3c] sm:$0xf]
    %v84 = vunpack.c.l.b16 %v52
    %v85 = vunpack.c.l.b16 %v53
    %v86 = vunpack.c.l.b16 %v54
    %v87 = vunpack.c.l.b16 %v55
    %v88 = vunpack.c.l.b16 %v56
    %v89 = vunpack.c.l.b16 %v57
    %v90 = vunpack.c.l.b16 %v58
    %v91 = vunpack.c.l.b16 %v59
    %v92 = vunpack.c.l.b16 %v60
    %v93 = vunpack.c.l.b16 %v61
    %v94 = vunpack.c.l.b16 %v62
    %v95 = vunpack.c.l.b16 %v63
    %v96 = vunpack.c.l.b16 %v64
    %v97 = vunpack.c.l.b16 %v65
    %v98 = vunpack.c.l.b16 %v66
    %v99 = vunpack.c.l.b16 %v67
    %v100 = vpack.c.b16 %v85, %v84
    %v101 = vpack.c.b16 %v87, %v86
    %v102 = vpack.c.b16 %v89, %v88
    %v103 = vpack.c.b16 %v91, %v90
    %v104 = vpack.c.b16 %v93, %v92
    %v105 = vpack.c.b16 %v95, %v94
    %v106 = vpack.c.b16 %v97, %v96
    %v107 = vpack.c.b16 %v99, %v98
    %116 = vmatpush.bf16.msra.mxu0 %v107
    %117 = vmatpush.bf16.msra.mxu0 %v106
    %118 = vmatpush.bf16.msra.mxu0 %v105
    %119 = vmatpush.bf16.msra.mxu0 %v104
    %120 = vmatpush.bf16.msra.mxu0 %v103
    %121 = vmatpush.bf16.msra.mxu0 %v102
    %122 = vmatpush.bf16.msra.mxu0 %v101
    %123 = vmatpush.bf16.msra.mxu0 %v100
    %124 = vmatmul.bf16.gmra.mxu0 %v51
    %v125 = vpop.f32.mrf.mxu0
    %v126 = vadd.f32 0.0, %v125
    %v127 = vpop.f32.mrf.mxu0
    %128 = vdwg.mxu0
    %v129 = vadd.f32 %v50, %v126
    %130 = vst [vmem:[#allocation7] sm:$0xff] %v129
    // Predicated region
    $region26: #{tpu_custom_call.1} parent=1 // pred_check
      %p131 = pneg %p45
    $region27: #{tpu_custom_call.1} parent=1 // pred_check_branch
      %133 = sbr.rel (%p131) target = $region29
    $region28: #{tpu_custom_call.1} parent=1 // pred_region
      %v134 = vld [vmem:[#allocation7] sm:$0xff]
      %v135 = vld [vmem:[%s2] sm:$0x1]
      %v137 = vperm.slane %v135, 0
      %v139 = vadd.f32 %v134, %v137
      %v140 = vmax.f32 %v139, 0.0
      %141 = vst [vmem:[#allocation7] sm:$0xff] %v140
    $region29: #{tpu_custom_call.1} parent=1 // pred_fallthru
      _
    // Predicated region
    $region30: #{tpu_custom_call.1} parent=1 // pred_check
      _
    $region31: #{tpu_custom_call.1} parent=1 // pred_check_branch
      %143 = sbr.rel (0) target = $region33
    $region32: #{tpu_custom_call.1} parent=1 // pred_region
      %145 = vsyncadd [#allocation4], 0
      %s147 = sshll.u32 [#allocation7], 4
      %s148 = int_to_ptr.vmem [resolvable:$true] %s147
      %s149 = sshll.u32 %s3, 4
      %s150 = int_to_ptr.hbm [resolvable:$true] %s149
      %152 = dma.vmem_to_hbm [thread:$0]  %s148, 128, %s150, [#allocation4]
    $region33: #{tpu_custom_call.1} parent=1 // pred_fallthru
      _
    // Predicated region
    $region34: #{tpu_custom_call.1} parent=1 // pred_check
      _
    $region35: #{tpu_custom_call.1} parent=1 // pred_check_branch
      %154 = sbr.rel (0) target = $region37
    $region36: #{tpu_custom_call.1} parent=1 // pred_region
      %156 = dma.done [#allocation4], 128
    $region37: #{tpu_custom_call.1} parent=1 // pred_fallthru
      _
    %157 = vsyncpa [#allocation3], 1
    %158 = vsyncpa [#allocation6], 1
    %159 = vsyncpa [#allocation4], 1

</llo_original>
